<compile_context>
chip_gen: v6e
topology: v6e:2x2x1
jax: 0.10.0
libtpu: 0.0.40
codegen_flags: <defaults>
</compile_context>

<pallas_src>
import jax
import jax.numpy as jnp
from jax.experimental import pallas as pl
from jax.experimental.pallas import tpu as pltpu


def _round_up(a, b):
    return (a + b - 1) // b * b


# -----------------------------------------------------------------------------
# Kernels
# -----------------------------------------------------------------------------
def _qil_kernel_single_k(x_ref, wr_ref, wi_ref, out_ref):
    """K fits in one tile: no scratch, dots + magnitude fused, written once."""
    real = jnp.dot(x_ref[...], wr_ref[...], preferred_element_type=jnp.float32)
    imag = jnp.dot(x_ref[...], wi_ref[...], preferred_element_type=jnp.float32)
    out_ref[...] = jnp.sqrt(real * real + imag * imag)


def _qil_kernel_multi_k(x_ref, wr_ref, wi_ref, out_ref, acc_r, acc_i):
    """K split across the innermost ('arbitrary') grid axis; f32 accumulators
    stay resident across K, the nonlinear magnitude runs only on the last step."""
    k = pl.program_id(2)

    pr = jnp.dot(x_ref[...], wr_ref[...], preferred_element_type=jnp.float32)
    pi = jnp.dot(x_ref[...], wi_ref[...], preferred_element_type=jnp.float32)

    @pl.when(k == 0)
    def _():
        acc_r[...] = pr
        acc_i[...] = pi

    @pl.when(k > 0)
    def _():
        acc_r[...] += pr
        acc_i[...] += pi

    @pl.when(k == pl.num_programs(2) - 1)
    def _():
        r = acc_r[...]
        i = acc_i[...]
        out_ref[...] = jnp.sqrt(r * r + i * i)


# -----------------------------------------------------------------------------
# Tile selection
# -----------------------------------------------------------------------------
# Conservative double-buffered working-set budget: safe on v7x (64 MiB VMEM/TC)
# and leaves headroom on v5e/v6e (128 MiB).
_VMEM_BUDGET = 44 * 1024 * 1024


def _footprint_bytes(tm, tn, tk, in_bytes):
    x_b = 2 * tm * tk * in_bytes           # double-buffered x tile
    w_b = 2 * 2 * tk * tn * in_bytes       # double-buffered cos + sin tiles
    out_b = 2 * tm * tn * 4                # double-buffered f32 output tile
    acc_b = 2 * tm * tn * 4                # resident f32 accumulators (r + i)
    return x_b + w_b + out_b + acc_b


def _choose_tiles(M, N, K, in_bytes, m_align):
    tm = min(512, _round_up(M, m_align))
    tn = _round_up(N, 128)
    if tn > 1024:                          # re-tile N only when it is very wide
        tn = 512
    tk = min(1024, _round_up(K, 128))

    # Shrink tk first (accumulator RMW amortization already paid), then tn,
    # then tm, until the working set fits the cross-generation VMEM budget.
    while _footprint_bytes(tm, tn, tk, in_bytes) > _VMEM_BUDGET and tk > 128:
        tk = max(128, _round_up(tk // 2, 128))
    while _footprint_bytes(tm, tn, tk, in_bytes) > _VMEM_BUDGET and tn > 128:
        tn = max(128, _round_up(tn // 2, 128))
    while _footprint_bytes(tm, tn, tk, in_bytes) > _VMEM_BUDGET and tm > m_align:
        tm = max(m_align, _round_up(tm // 2, m_align))

    # Megacore (v7x has 2 TCs): keep the parallel (M, N) tile product >= 2 when
    # M allows, by shrinking tm instead of leaving one TensorCore idle.
    m_tiles = _round_up(M, tm) // tm
    n_tiles = _round_up(N, tn) // tn
    if m_tiles * n_tiles == 1 and _round_up(M, m_align) >= 2 * m_align:
        tm = max(m_align, _round_up(-(-M // 2), m_align))
    return tm, tn, tk


# -----------------------------------------------------------------------------
# Wrapper
# -----------------------------------------------------------------------------
def quantum_inspired_layer(x, theta_noisy, phi_noisy, *, tm=None, tn=None,
                           tk=None, use_bf16=False):
    """x: (B, T, K) f32, theta_noisy/phi_noisy: (K, N) f32 -> (B, T, N) f32."""
    B, T, K = x.shape
    Kw, N = theta_noisy.shape
    assert K == Kw, "input_size mismatch between x and parameters"
    M = B * T

    in_dtype = jnp.bfloat16 if use_bf16 else jnp.float32
    in_bytes = 2 if use_bf16 else 4
    m_align = 16 if use_bf16 else 8

    # Hoist transcendentals out of the kernel: computed once per call, reused
    # by every M tile.
    cos_w = jnp.cos(theta_noisy)
    sin_w = jnp.sin(phi_noisy)

    auto_tm, auto_tn, auto_tk = _choose_tiles(M, N, K, in_bytes, m_align)
    tm = tm or auto_tm
    tn = tn or auto_tn
    tk = tk or auto_tk
    # Validate (also user-supplied) tiles against the (sublane, lane) rules.
    assert tm % m_align == 0, f"tm must be a multiple of {m_align}"
    assert tn % 128 == 0, "tn must be a multiple of 128"
    assert tk % 128 == 0, "tk must be a multiple of 128"

    M_pad = _round_up(M, tm)
    N_pad = _round_up(N, tn)
    K_pad = _round_up(K, tk)

    # x as a row-major (M, K) matrix; the reshape is free, the pad is a full
    # extra HBM round-trip -> only emit it when actually needed.
    x2d = x.reshape(M, K)
    if M_pad != M or K_pad != K:
        x2d = jnp.pad(x2d, ((0, M_pad - M), (0, K_pad - K)))
    if K_pad != K or N_pad != N:
        cos_w = jnp.pad(cos_w, ((0, K_pad - K), (0, N_pad - N)))
        sin_w = jnp.pad(sin_w, ((0, K_pad - K), (0, N_pad - N)))

    x2d = x2d.astype(in_dtype)
    cos_w = cos_w.astype(in_dtype)
    sin_w = sin_w.astype(in_dtype)

    # VMEM limit derived from the actual tile footprint (+ headroom), capped
    # well below v5e/v6e physical and within the budget already enforced above.
    vmem_limit = min(
        max(_footprint_bytes(tm, tn, tk, in_bytes) + 8 * 1024 * 1024,
            32 * 1024 * 1024),
        96 * 1024 * 1024,
    )

    single_k = (K_pad == tk)
    if single_k:
        grid = (M_pad // tm, N_pad // tn)
        kernel = _qil_kernel_single_k
        in_specs = [
            pl.BlockSpec((tm, tk), lambda i, j: (i, 0)),
            pl.BlockSpec((tk, tn), lambda i, j: (0, j)),
            pl.BlockSpec((tk, tn), lambda i, j: (0, j)),
        ]
        out_specs = pl.BlockSpec((tm, tn), lambda i, j: (i, j))
        scratch_shapes = []
        dim_sem = ("parallel", "parallel")
    else:
        grid = (M_pad // tm, N_pad // tn, K_pad // tk)
        kernel = _qil_kernel_multi_k
        in_specs = [
            pl.BlockSpec((tm, tk), lambda i, j, k: (i, k)),
            pl.BlockSpec((tk, tn), lambda i, j, k: (k, j)),
            pl.BlockSpec((tk, tn), lambda i, j, k: (k, j)),
        ]
        out_specs = pl.BlockSpec((tm, tn), lambda i, j, k: (i, j))
        scratch_shapes = [pltpu.VMEM((tm, tn), jnp.float32),
                          pltpu.VMEM((tm, tn), jnp.float32)]
        dim_sem = ("parallel", "parallel", "arbitrary")

    out2d = pl.pallas_call(
        kernel,
        out_shape=jax.ShapeDtypeStruct((M_pad, N_pad), jnp.float32),
        grid_spec=pltpu.PrefetchScalarGridSpec(
            num_scalar_prefetch=0,
            grid=grid,
            in_specs=in_specs,
            out_specs=out_specs,
            scratch_shapes=scratch_shapes,
        ),
        compiler_params=pltpu.CompilerParams(
            dimension_semantics=dim_sem,
            vmem_limit_bytes=vmem_limit,
        ),
    )(x2d, cos_w, sin_w)

    if M_pad != M or N_pad != N:
        out2d = out2d[:M, :N]
    return out2d.reshape(B, T, N)


# -----------------------------------------------------------------------------
# Demo / correctness check
# -----------------------------------------------------------------------------
def _reference(x, theta_noisy, phi_noisy):
    psi_real = jnp.cos(theta_noisy)
    psi_imag = jnp.sin(phi_noisy)
    return jnp.sqrt(
        jnp.einsum("btk,kn->btn", x, psi_real) ** 2
        + jnp.einsum("btk,kn->btn", x, psi_imag) ** 2
    )


if __name__ == "__main__":
    # TODO(synk): torch.randn_like forward-time noise is drawn per call inside
    # the module; here it is generated deterministically in the host wrapper
    # (no in-kernel RNG needed for the forward math).
    key = jax.random.PRNGKey(0)

    # --- Test 1: module-typical small shapes (single-K-tile fast path). ------
    B, T, K, N = 2, 8, 32, 32
    k_x, k_theta, k_phi, k_tn, k_pn, key = jax.random.split(key, 6)
    theta = jax.random.normal(k_theta, (K, N), dtype=jnp.float32) * 0.02
    phi = jax.random.normal(k_phi, (K, N), dtype=jnp.float32) * 0.02
    theta_noisy = theta + jax.random.normal(k_tn, (K, N), dtype=jnp.float32) * 0.01
    phi_noisy = phi + jax.random.normal(k_pn, (K, N), dtype=jnp.float32) * 0.01
    x = jax.random.normal(k_x, (B, T, K), dtype=jnp.float32)

    out = jax.block_until_ready(quantum_inspired_layer(x, theta_noisy, phi_noisy))
    ref = _reference(x, theta_noisy, phi_noisy)
    assert out.shape == (B, T, N)
    assert jnp.allclose(out, ref, atol=1e-5, rtol=1e-5)

    # --- Test 2: force the multi-K accumulator path (tk override). -----------
    B2, T2, K2, N2 = 2, 8, 160, 32
    k_x2, k_t2, k_p2 = jax.random.split(key, 3)
    theta2 = jax.random.normal(k_t2, (K2, N2), dtype=jnp.float32) * 0.02
    phi2 = jax.random.normal(k_p2, (K2, N2), dtype=jnp.float32) * 0.02
    x2 = jax.random.normal(k_x2, (B2, T2, K2), dtype=jnp.float32)

    out2 = jax.block_until_ready(
        quantum_inspired_layer(x2, theta2, phi2, tk=128)  # K_pad=256 -> 2 K tiles
    )
    ref2 = _reference(x2, theta2, phi2)
    assert out2.shape == (B2, T2, N2)
    assert jnp.allclose(out2, ref2, atol=1e-5, rtol=1e-5)

    print("KERNEL_OK")
</pallas_src>

<mosaic_0001>
module attributes {stable_mosaic.version = 11 : i64} {
  func.func @_qil_kernel_single_k(%arg0: i32, %arg1: i32, %arg2: memref<8x128xf32, #tpu.memory_space<vmem>>, %arg3: memref<128x128xf32, #tpu.memory_space<vmem>>, %arg4: memref<128x128xf32, #tpu.memory_space<vmem>>, %arg5: memref<8x128xf32, #tpu.memory_space<vmem>>) attributes {dimension_semantics = [#tpu.dimension_semantics<parallel>, #tpu.dimension_semantics<parallel>], iteration_bounds = array<i64: 2, 1>, scalar_prefetch = 0 : i64, scratch_operands = 0 : i64, tpu.core_type = #tpu.core_type<tc>, window_params = [{transform_indices = @transform_0, window_bounds = array<i64: 8, 128>}, {transform_indices = @transform_1, window_bounds = array<i64: 128, 128>}, {transform_indices = @transform_2, window_bounds = array<i64: 128, 128>}, {transform_indices = @transform_3, window_bounds = array<i64: 8, 128>}]} {
    %c0 = arith.constant 0 : index
    %c0_0 = arith.constant 0 : index
    %0 = vector.load %arg2[%c0, %c0_0] : memref<8x128xf32, #tpu.memory_space<vmem>>, vector<8x128xf32>
    %c0_1 = arith.constant 0 : index
    %c0_2 = arith.constant 0 : index
    %1 = vector.load %arg3[%c0_1, %c0_2] : memref<128x128xf32, #tpu.memory_space<vmem>>, vector<128x128xf32>
    %cst = arith.constant dense<0.000000e+00> : vector<8x128xf32>
    %2 = tpu.matmul %0, %1, %cst {dimension_numbers = #tpu.dot_dimension_numbers<[1], [0], [0], [1], [0, 0, 1, 1], [], []>} : vector<8x128xf32>, vector<128x128xf32>, vector<8x128xf32> -> vector<8x128xf32>
    %c0_3 = arith.constant 0 : index
    %c0_4 = arith.constant 0 : index
    %3 = vector.load %arg2[%c0_3, %c0_4] : memref<8x128xf32, #tpu.memory_space<vmem>>, vector<8x128xf32>
    %c0_5 = arith.constant 0 : index
    %c0_6 = arith.constant 0 : index
    %4 = vector.load %arg4[%c0_5, %c0_6] : memref<128x128xf32, #tpu.memory_space<vmem>>, vector<128x128xf32>
    %cst_7 = arith.constant dense<0.000000e+00> : vector<8x128xf32>
    %5 = tpu.matmul %3, %4, %cst_7 {dimension_numbers = #tpu.dot_dimension_numbers<[1], [0], [0], [1], [0, 0, 1, 1], [], []>} : vector<8x128xf32>, vector<128x128xf32>, vector<8x128xf32> -> vector<8x128xf32>
    %6 = arith.mulf %2, %2 : vector<8x128xf32>
    %7 = arith.mulf %5, %5 : vector<8x128xf32>
    %8 = arith.addf %6, %7 : vector<8x128xf32>
    %9 = math.sqrt %8 : vector<8x128xf32>
    %c0_8 = arith.constant 0 : index
    %c0_9 = arith.constant 0 : index
    %10 = vector.load %arg5[%c0_8, %c0_9] : memref<8x128xf32, #tpu.memory_space<vmem>>, vector<8x128xf32>
    tpu.vector_store %arg5[%c0_8, %c0_9], %9 {strides = array<i32>} : memref<8x128xf32, #tpu.memory_space<vmem>>, vector<8x128xf32>,
    return
  }
  func.func @transform_0(%arg0: i32, %arg1: i32) -> (i32, i32) {
    %c0_i32 = arith.constant 0 : i32
    %c0_i32_0 = arith.constant 0 : i32
    return %arg0, %c0_i32 : i32, i32
  }
  func.func @transform_1(%arg0: i32, %arg1: i32) -> (i32, i32) {
    %c0_i32 = arith.constant 0 : i32
    %c0_i32_0 = arith.constant 0 : i32
    return %c0_i32, %arg1 : i32, i32
  }
  func.func @transform_2(%arg0: i32, %arg1: i32) -> (i32, i32) {
    %c0_i32 = arith.constant 0 : i32
    %c0_i32_0 = arith.constant 0 : i32
    return %c0_i32, %arg1 : i32, i32
  }
  func.func @transform_3(%arg0: i32, %arg1: i32) -> (i32, i32) {
    %c0_i32 = arith.constant 0 : i32
    return %arg0, %arg1 : i32, i32
  }
}

</mosaic_0001>

<llo_original>
// kernel: tpu_custom_call.1
$region0: #{tpu_custom_call.1}
  #allocation0 [shape = 'u32[]', space=smem, size = 0x4, offset = 0x4, fixed_abs, tag = 'smem constant byte address 0x4 - core index']
  #allocation1 [shape = 'u32[144,128]{1,0:T(1,128)}', space=vmem, size = 0x12000, scoped, tag = 'internal scratch']
  %s0 = inlined_call_operand.hbm [shape: f32[16,128], index: 0, kind: input, shape index: {}]
  %s1 = inlined_call_operand.hbm [shape: f32[128,128], index: 1, kind: input, shape index: {}]
  %s2 = inlined_call_operand.hbm [shape: f32[128,128], index: 2, kind: input, shape index: {}]
  %s3 = inlined_call_operand.hbm [shape: f32[16,128], index: 3, kind: output, shape index: {}]
  %s4 = sld [smem:[#allocation0]]
  $region57: #{tpu_custom_call.1} parent=0
    _
  %s6 = ssub.s32 1, %s4
  %s7 = scalar_select 0, %s6, %s4
  $region1: #{tpu_custom_call.1} parent=0
    #allocation2 [shape = 'u8[8192]{0}', space=vmem, size = 0x2000, scoped, tag = 'input window, operand 0']
    #allocation3 [shape = 's32[2]{0}', space=sflag, size = 0x8, scoped, tag = 'scoped memory for tpu_custom_call.1']
    #allocation4 [shape = 's32[2]{0}', space=sflag, size = 0x8, scoped, tag = 'scoped memory for tpu_custom_call.1']
    #allocation5 [shape = 'u8[65536]{0}', space=vmem, size = 0x10000, scoped, tag = 'input window, operand 1, single buffered']
    #allocation6 [shape = 's32[1]{0}', space=sflag, size = 0x4, scoped, tag = 'scoped memory for tpu_custom_call.1']
    #allocation7 [shape = 'u8[65536]{0}', space=vmem, size = 0x10000, scoped, tag = 'input window, operand 2, single buffered']
    #allocation8 [shape = 'u8[8192]{0}', space=vmem, size = 0x2000, scoped, tag = 'output window, operand 0']
    %8 = vsyncpa [#allocation3], 0
    %s9 = scalar_lea.sflag [#allocation3], 1
    %10 = vsyncpa %s9, 0
    %11 = vsyncpa [#allocation6], 0
    %12 = vsyncpa [#allocation4], 0
    %s13 = scalar_lea.sflag [#allocation4], 1
    %14 = vsyncpa %s13, 0
    loop: start=0, step=1, limit=4
    $region2: #{tpu_custom_call.1} parent=1 // loop_pre_header
      _
    $region3: #{tpu_custom_call.1} parent=1 // loop_header
      %s16 = sphi 0, %s20
      %p17 = scmp.ge.s32.totalorder %s16, 4
      %s23 = sphi 0, %s35
      %s24 = sphi 0, %s31
      %s25 = sphi 0, %s23
      %s26 = sphi 0, %s24
      %s27 = sphi 0, %s25
      %s28 = sphi 0, %s26
      %s38 = sphi 0, %s40
      %s41 = sphi 0, %s38
      %s42 = sphi 0, %s41
      %s58 = sphi 0, %s42
      %s64 = sphi 0, %s66
      %s67 = sphi 0, %s64
      %s68 = sphi 0, %s67
      %s84 = sphi 0, %s68
      %s90 = sphi 0, %s92
      %s93 = sphi 0, %s90
      %s94 = sphi 0, %s93
      %s110 = sphi 0, %s94
      %s118 = sphi 0, %s120
      %s121 = sphi 0, %s118
      %s122 = sphi 0, %s121
      %s138 = sphi 0, %s122
    $region4: #{tpu_custom_call.1} parent=1 // loop_header_branch
      %19 = sbr.rel (%p17) target = $region8
    $region5: #{tpu_custom_call.1} parent=1 // loop_body
      %s21 = ssub.s32 %s16, 1
      %s22 = ssub.s32 %s16, 2
      %s29 = sadd.s32 1, %s24
      %p30 = scmp.ge.s32.totalorder %s29, 1
      %s31 = scalar_select %p30, 0, %s29
      %s32 = sadd.s32 1, %s23
      %s33 = scalar_select %p30, %s32, %s23
      %p34 = scmp.ge.s32.totalorder %s33, 2
      %s35 = scalar_select %p34, 0, %s33
      %s36 = ssub.s32 %s23, %s35
      %p37 = scmp.eq.s32.totalorder %s36, 0
      %s39 = sadd.s32 %s38, 1
      %s40 = scalar_select %p37, %s38, %s39
      %p43 = pneg %p37
      %p44 = scmp.eq.s32.totalorder %s16, 1
      %p45 = por %p43, %p44
      %p46 = scmp.ne.s32.totalorder %s38, %s41
      %p47 = scmp.eq.s32.totalorder %s16, 0
      %p48 = por %p46, %p47
      %p49 = scmp.ne.s32.totalorder %s38, %s41
      %p50 = scmp.eq.s32.totalorder %s21, 1
      %p51 = por %p49, %p50
      %p52 = scmp.ne.s32.totalorder %s41, %s42
      %p53 = scmp.eq.s32.totalorder %s21, 0
      %p54 = por %p52, %p53
      %p55 = scmp.ne.s32.totalorder %s41, %s42
      %p56 = scmp.eq.s32.totalorder %s22, 1
      %p57 = por %p55, %p56
      %p59 = scmp.ne.s32.totalorder %s42, %s58
      %p60 = scmp.eq.s32.totalorder %s22, 0
      %p61 = por %p59, %p60
      %s62 = ssub.s32 %s24, %s31
      %p63 = scmp.eq.s32.totalorder %s62, 0
      %s65 = sadd.s32 %s64, 1
      %s66 = scalar_select %p63, %s64, %s65
      %p69 = pneg %p63
      %p70 = scmp.eq.s32.totalorder %s16, 1
      %p71 = por %p69, %p70
      %p72 = scmp.ne.s32.totalorder %s64, %s67
      %p73 = scmp.eq.s32.totalorder %s16, 0
      %p74 = por %p72, %p73
      %p75 = scmp.ne.s32.totalorder %s64, %s67
      %p76 = scmp.eq.s32.totalorder %s21, 1
      %p77 = por %p75, %p76
      %p78 = scmp.ne.s32.totalorder %s67, %s68
      %p79 = scmp.eq.s32.totalorder %s21, 0
      %p80 = por %p78, %p79
      %p81 = scmp.ne.s32.totalorder %s67, %s68
      %p82 = scmp.eq.s32.totalorder %s22, 1
      %p83 = por %p81, %p82
      %p85 = scmp.ne.s32.totalorder %s68, %s84
      %p86 = scmp.eq.s32.totalorder %s22, 0
      %p87 = por %p85, %p86
      %s88 = ssub.s32 %s24, %s31
      %p89 = scmp.eq.s32.totalorder %s88, 0
      %s91 = sadd.s32 %s90, 1
      %s92 = scalar_select %p89, %s90, %s91
      %p95 = pneg %p89
      %p96 = scmp.eq.s32.totalorder %s16, 1
      %p97 = por %p95, %p96
      %p98 = scmp.ne.s32.totalorder %s90, %s93
      %p99 = scmp.eq.s32.totalorder %s16, 0
      %p100 = por %p98, %p99
      %p101 = scmp.ne.s32.totalorder %s90, %s93
      %p102 = scmp.eq.s32.totalorder %s21, 1
      %p103 = por %p101, %p102
      %p104 = scmp.ne.s32.totalorder %s93, %s94
      %p105 = scmp.eq.s32.totalorder %s21, 0
      %p106 = por %p104, %p105
      %p107 = scmp.ne.s32.totalorder %s93, %s94
      %p108 = scmp.eq.s32.totalorder %s22, 1
      %p109 = por %p107, %p108
      %p111 = scmp.ne.s32.totalorder %s94, %s110
      %p112 = scmp.eq.s32.totalorder %s22, 0
      %p113 = por %p111, %p112
      %s114 = ssub.s32 %s23, %s35
      %s115 = ssub.s32 %s24, %s31
      %s116 = sor.u32 %s114, %s115
      %p117 = scmp.eq.s32.totalorder %s116, 0
      %s119 = sadd.s32 %s118, 1
      %s120 = scalar_select %p117, %s118, %s119
      %p123 = pneg %p117
      %p124 = scmp.eq.s32.totalorder %s16, 1
      %p125 = por %p123, %p124
      %p126 = scmp.ne.s32.totalorder %s118, %s121
      %p127 = scmp.eq.s32.totalorder %s16, 0
      %p128 = por %p126, %p127
      %p129 = scmp.ne.s32.totalorder %s118, %s121
      %p130 = scmp.eq.s32.totalorder %s21, 1
      %p131 = por %p129, %p130
      %p132 = scmp.ne.s32.totalorder %s121, %s122
      %p133 = scmp.eq.s32.totalorder %s21, 0
      %p134 = por %p132, %p133
      %p135 = scmp.ne.s32.totalorder %s121, %s122
      %p136 = scmp.eq.s32.totalorder %s22, 1
      %p137 = por %p135, %p136
      %p139 = scmp.ne.s32.totalorder %s122, %s138
      %p140 = scmp.eq.s32.totalorder %s22, 0
      %p141 = por %p139, %p140
      %p142 = scmp.le.s32.totalorder 1, %s16
      %p143 = scmp.lt.s32.totalorder %s16, 3
      %p144 = pnand %p142, %p143
      %p145 = pneg %p144
      // Predicated region
      $region9: #{tpu_custom_call.1} parent=5 // pred_check
        _
      $region10: #{tpu_custom_call.1} parent=5 // pred_check_branch
        %147 = sbr.rel (%p144) target = $region12
      $region11: #{tpu_custom_call.1} parent=5 // pred_region
        %s148 = ssub.s32 %s16, 1
        // Predicated region
        $region13: #{tpu_custom_call.1} parent=11 // pred_check
          %p149 = pneg %p80
        $region14: #{tpu_custom_call.1} parent=11 // pred_check_branch
          %151 = sbr.rel (%p149) target = $region16
        $region15: #{tpu_custom_call.1} parent=11 // pred_region
          %s153 = ssub.s32 2048, 2048
          %154 = vsyncadd [#allocation6], %s153
          %s155 = smul.addr %s26, 128
          %s156 = scalar_lea.hbm %s1, %s155
          %s157 = sshll.u32 [#allocation5], 4
          %s158 = int_to_ptr.vmem [resolvable:$true] %s157
          %163 = dma.hbm_to_vmem [thread:$0]  %s156, 2048, %s158, [#allocation6], 128, 128, 8
        $region16: #{tpu_custom_call.1} parent=11 // pred_fallthru
          _
        // Predicated region
        $region17: #{tpu_custom_call.1} parent=11 // pred_check
          %p164 = pneg %p106
        $region18: #{tpu_custom_call.1} parent=11 // pred_check_branch
          %166 = sbr.rel (%p164) target = $region20
        $region19: #{tpu_custom_call.1} parent=11 // pred_region
          %s168 = ssub.s32 2048, 2048
          %169 = vsyncadd [#allocation6], %s168
          %s170 = smul.addr %s26, 128
          %s171 = scalar_lea.hbm %s2, %s170
          %s172 = sshll.u32 [#allocation7], 4
          %s173 = int_to_ptr.vmem [resolvable:$true] %s172
          %178 = dma.hbm_to_vmem [thread:$0]  %s171, 2048, %s173, [#allocation6], 128, 128, 8
        $region20: #{tpu_custom_call.1} parent=11 // pred_fallthru
          _
      $region12: #{tpu_custom_call.1} parent=5 // pred_fallthru
        _
      %p179 = scmp.lt.s32.totalorder %s16, 2
      // Predicated region
      $region21: #{tpu_custom_call.1} parent=5 // pred_check
        %p180 = pneg %p179
      $region22: #{tpu_custom_call.1} parent=5 // pred_check_branch
        %182 = sbr.rel (%p180) target = $region24
      $region23: #{tpu_custom_call.1} parent=5 // pred_region
        // Predicated region
        $region25: #{tpu_custom_call.1} parent=23 // pred_check
          %p183 = pneg %p48
        $region26: #{tpu_custom_call.1} parent=23 // pred_check_branch
          %185 = sbr.rel (%p183) target = $region28
        $region27: #{tpu_custom_call.1} parent=23 // pred_region
          %s186 = sand.u32 %s38, 1
          %s187 = scalar_lea.sflag [#allocation3], %s186
          %s188 = sand.u32 %s38, 1
          %s189 = smul.addr %s188, 8
          %s190 = scalar_lea.vmem [#allocation2], %s189
          %s192 = ssub.s32 128, 128
          %193 = vsyncadd %s187, %s192
          %s194 = smul.addr %s23, 128
          %s195 = scalar_lea.hbm %s0, %s194
          %s197 = sshll.u32 %s190, 4
          %s198 = int_to_ptr.vmem [resolvable:$true] %s197
          %200 = dma.hbm_to_vmem [thread:$0]  %s195, 128, %s198, %s187
        $region28: #{tpu_custom_call.1} parent=23 // pred_fallthru
          _
      $region24: #{tpu_custom_call.1} parent=5 // pred_fallthru
        _
      %p201 = scmp.le.s32.totalorder 1, %s16
      %p202 = scmp.lt.s32.totalorder %s16, 3
      %p203 = pnand %p201, %p202
      %p204 = pneg %p203
      // Predicated region
      $region29: #{tpu_custom_call.1} parent=5 // pred_check
        _
      $region30: #{tpu_custom_call.1} parent=5 // pred_check_branch
        %206 = sbr.rel (%p203) target = $region32
      $region31: #{tpu_custom_call.1} parent=5 // pred_region
        %s207 = ssub.s32 %s16, 1
        %s208 = sand.u32 %s41, 1
        %s209 = scalar_lea.sflag [#allocation3], %s208
        %s210 = sand.u32 %s41, 1
        %s211 = smul.addr %s210, 8
        %s212 = scalar_lea.vmem [#allocation2], %s211
        // Predicated region
        $region33: #{tpu_custom_call.1} parent=31 // pred_check
          %p213 = pneg %p54
        $region34: #{tpu_custom_call.1} parent=31 // pred_check_branch
          %215 = sbr.rel (%p213) target = $region36
        $region35: #{tpu_custom_call.1} parent=31 // pred_region
          %216 = dma.done %s209, 128
        $region36: #{tpu_custom_call.1} parent=31 // pred_fallthru
          _
        // Predicated region
        $region37: #{tpu_custom_call.1} parent=31 // pred_check
          %p217 = pneg %p80
        $region38: #{tpu_custom_call.1} parent=31 // pred_check_branch
          %219 = sbr.rel (%p217) target = $region40
        $region39: #{tpu_custom_call.1} parent=31 // pred_region
          %220 = dma.done [#allocation6], 2048
        $region40: #{tpu_custom_call.1} parent=31 // pred_fallthru
          _
        // Predicated region
        $region41: #{tpu_custom_call.1} parent=31 // pred_check
          %p221 = pneg %p106
        $region42: #{tpu_custom_call.1} parent=31 // pred_check_branch
          %223 = sbr.rel (%p221) target = $region44
        $region43: #{tpu_custom_call.1} parent=31 // pred_region
          %224 = dma.done [#allocation6], 2048
        $region44: #{tpu_custom_call.1} parent=31 // pred_fallthru
          _
        %s225 = sand.u32 %s41, 1
        %s226 = scalar_lea.sflag [#allocation3], %s225
        %s227 = sand.u32 %s41, 1
        %s228 = smul.addr %s227, 8
        %s229 = scalar_lea.vmem [#allocation2], %s228
        %p230 = pneg %p54
        %p231 = pneg %p51
        %p232 = pneg %p80
        %p233 = pneg %p77
        %p234 = pneg %p106
        %p235 = pneg %p103
        %p236 = pneg %p134
        %p237 = pneg %p131
        %s238 = sand.u32 %s121, 1
        %s239 = scalar_lea.sflag [#allocation4], %s238
        %s240 = sand.u32 %s121, 1
        %s241 = smul.addr %s240, 8
        %s242 = scalar_lea.vmem [#allocation8], %s241
        %v243 = vld [vmem:[%s212] sm:$0xff]
        %v244 = vld [vmem:[#allocation5] sm:$0xff]
        %v245 = vld [vmem:[#allocation5 + $0x8] sm:$0xff]
        %v246 = vld [vmem:[#allocation5 + $0x10] sm:$0xff]
        %v247 = vld [vmem:[#allocation5 + $0x18] sm:$0xff]
        %v248 = vld [vmem:[#allocation5 + $0x20] sm:$0xff]
        %v249 = vld [vmem:[#allocation5 + $0x28] sm:$0xff]
        %v250 = vld [vmem:[#allocation5 + $0x30] sm:$0xff]
        %v251 = vld [vmem:[#allocation5 + $0x38] sm:$0xff]
        %v252 = vld [vmem:[#allocation5 + $0x40] sm:$0xff]
        %v253 = vld [vmem:[#allocation5 + $0x48] sm:$0xff]
        %v254 = vld [vmem:[#allocation5 + $0x50] sm:$0xff]
        %v255 = vld [vmem:[#allocation5 + $0x58] sm:$0xff]
        %v256 = vld [vmem:[#allocation5 + $0x60] sm:$0xff]
        %v257 = vld [vmem:[#allocation5 + $0x68] sm:$0xff]
        %v258 = vld [vmem:[#allocation5 + $0x70] sm:$0xff]
        %v259 = vld [vmem:[#allocation5 + $0x78] sm:$0xff]
        %260 = vmatprep.subr.mxu0 0.0
        %261 = vmatpush1.msra.mxu0 %v259
        %262 = vmatprep.subr.mxu0 0.0
        %263 = vmatpush1.msra.mxu0 %v258
        %264 = vmatprep.subr.mxu0 0.0
        %265 = vmatpush1.msra.mxu0 %v257
        %266 = vmatprep.subr.mxu0 0.0
        %267 = vmatpush1.msra.mxu0 %v256
        %268 = vmatprep.subr.mxu0 0.0
        %269 = vmatpush1.msra.mxu0 %v255
        %270 = vmatprep.subr.mxu0 0.0
        %271 = vmatpush1.msra.mxu0 %v254
        %272 = vmatprep.subr.mxu0 0.0
        %273 = vmatpush1.msra.mxu0 %v253
        %274 = vmatprep.subr.mxu0 0.0
        %275 = vmatpush1.msra.mxu0 %v252
        %276 = vmatprep.subr.mxu0 0.0
        %277 = vmatpush1.msra.mxu0 %v251
        %278 = vmatprep.subr.mxu0 0.0
        %279 = vmatpush1.msra.mxu0 %v250
        %280 = vmatprep.subr.mxu0 0.0
        %281 = vmatpush1.msra.mxu0 %v249
        %282 = vmatprep.subr.mxu0 0.0
        %283 = vmatpush1.msra.mxu0 %v248
        %284 = vmatprep.subr.mxu0 0.0
        %285 = vmatpush1.msra.mxu0 %v247
        %286 = vmatprep.subr.mxu0 0.0
        %287 = vmatpush1.msra.mxu0 %v246
        %288 = vmatprep.subr.mxu0 0.0
        %289 = vmatpush1.msra.mxu0 %v245
        %290 = vmatprep.subr.mxu0 0.0
        %291 = vmatpush1.msra.mxu0 %v244
        %292 = vmatprep.subr.mxu0 0.0
        %293 = vmatpush2.msra.mxu0 0.0
        %294 = vmatprep.subr.mxu0 0.0
        %295 = vmatpush2.msra.mxu0 0.0
        %296 = vmatprep.subr.mxu0 0.0
        %297 = vmatpush2.msra.mxu0 0.0
        %298 = vmatprep.subr.mxu0 0.0
        %299 = vmatpush2.msra.mxu0 0.0
        %300 = vmatprep.subr.mxu0 0.0
        %301 = vmatpush2.msra.mxu0 0.0
        %302 = vmatprep.subr.mxu0 0.0
        %303 = vmatpush2.msra.mxu0 0.0
        %304 = vmatprep.subr.mxu0 0.0
        %305 = vmatpush2.msra.mxu0 0.0
        %306 = vmatprep.subr.mxu0 0.0
        %307 = vmatpush2.msra.mxu0 0.0
        %308 = vmatprep.subr.mxu0 0.0
        %309 = vmatpush2.msra.mxu0 0.0
        %310 = vmatprep.subr.mxu0 0.0
        %311 = vmatpush2.msra.mxu0 0.0
        %312 = vmatprep.subr.mxu0 0.0
        %313 = vmatpush2.msra.mxu0 0.0
        %314 = vmatprep.subr.mxu0 0.0
        %315 = vmatpush2.msra.mxu0 0.0
        %316 = vmatprep.subr.mxu0 0.0
        %317 = vmatpush2.msra.mxu0 0.0
        %318 = vmatprep.subr.mxu0 0.0
        %319 = vmatpush2.msra.mxu0 0.0
        %320 = vmatprep.subr.mxu0 0.0
        %321 = vmatpush2.msra.mxu0 0.0
        %322 = vmatprep.subr.mxu0 0.0
        %323 = vmatpush2.msra.mxu0 0.0
        %324 = vmatprep.mubr.f32.mxu0 0.0
        %325 = vmatmul.mubr.f32.gmra.mxu0 %v243
        %v326 = vpop.f32.mrf.mxu0
        %v327 = vadd.f32 0.0, %v326
        %v328 = vpop.f32.mrf.mxu0
        %329 = vdwg.mxu0
        %v330 = vld [vmem:[#allocation7] sm:$0xff]
        %v331 = vld [vmem:[#allocation7 + $0x8] sm:$0xff]
        %v332 = vld [vmem:[#allocation7 + $0x10] sm:$0xff]
        %v333 = vld [vmem:[#allocation7 + $0x18] sm:$0xff]
        %v334 = vld [vmem:[#allocation7 + $0x20] sm:$0xff]
        %v335 = vld [vmem:[#allocation7 + $0x28] sm:$0xff]
        %v336 = vld [vmem:[#allocation7 + $0x30] sm:$0xff]
        %v337 = vld [vmem:[#allocation7 + $0x38] sm:$0xff]
        %v338 = vld [vmem:[#allocation7 + $0x40] sm:$0xff]
        %v339 = vld [vmem:[#allocation7 + $0x48] sm:$0xff]
        %v340 = vld [vmem:[#allocation7 + $0x50] sm:$0xff]
        %v341 = vld [vmem:[#allocation7 + $0x58] sm:$0xff]
        %v342 = vld [vmem:[#allocation7 + $0x60] sm:$0xff]
        %v343 = vld [vmem:[#allocation7 + $0x68] sm:$0xff]
        %v344 = vld [vmem:[#allocation7 + $0x70] sm:$0xff]
        %v345 = vld [vmem:[#allocation7 + $0x78] sm:$0xff]
        %346 = vmatprep.subr.mxu0 0.0
        %347 = vmatpush1.msra.mxu0 %v345
        %348 = vmatprep.subr.mxu0 0.0
        %349 = vmatpush1.msra.mxu0 %v344
        %350 = vmatprep.subr.mxu0 0.0
        %351 = vmatpush1.msra.mxu0 %v343
        %352 = vmatprep.subr.mxu0 0.0
        %353 = vmatpush1.msra.mxu0 %v342
        %354 = vmatprep.subr.mxu0 0.0
        %355 = vmatpush1.msra.mxu0 %v341
        %356 = vmatprep.subr.mxu0 0.0
        %357 = vmatpush1.msra.mxu0 %v340
        %358 = vmatprep.subr.mxu0 0.0
        %359 = vmatpush1.msra.mxu0 %v339
        %360 = vmatprep.subr.mxu0 0.0
        %361 = vmatpush1.msra.mxu0 %v338
        %362 = vmatprep.subr.mxu0 0.0
        %363 = vmatpush1.msra.mxu0 %v337
        %364 = vmatprep.subr.mxu0 0.0
        %365 = vmatpush1.msra.mxu0 %v336
        %366 = vmatprep.subr.mxu0 0.0
        %367 = vmatpush1.msra.mxu0 %v335
        %368 = vmatprep.subr.mxu0 0.0
        %369 = vmatpush1.msra.mxu0 %v334
        %370 = vmatprep.subr.mxu0 0.0
        %371 = vmatpush1.msra.mxu0 %v333
        %372 = vmatprep.subr.mxu0 0.0
        %373 = vmatpush1.msra.mxu0 %v332
        %374 = vmatprep.subr.mxu0 0.0
        %375 = vmatpush1.msra.mxu0 %v331
        %376 = vmatprep.subr.mxu0 0.0
        %377 = vmatpush1.msra.mxu0 %v330
        %378 = vmatprep.subr.mxu0 0.0
        %379 = vmatpush2.msra.mxu0 0.0
        %380 = vmatprep.subr.mxu0 0.0
        %381 = vmatpush2.msra.mxu0 0.0
        %382 = vmatprep.subr.mxu0 0.0
        %383 = vmatpush2.msra.mxu0 0.0
        %384 = vmatprep.subr.mxu0 0.0
        %385 = vmatpush2.msra.mxu0 0.0
        %386 = vmatprep.subr.mxu0 0.0
        %387 = vmatpush2.msra.mxu0 0.0
        %388 = vmatprep.subr.mxu0 0.0
        %389 = vmatpush2.msra.mxu0 0.0
        %390 = vmatprep.subr.mxu0 0.0
        %391 = vmatpush2.msra.mxu0 0.0
        %392 = vmatprep.subr.mxu0 0.0
        %393 = vmatpush2.msra.mxu0 0.0
        %394 = vmatprep.subr.mxu0 0.0
        %395 = vmatpush2.msra.mxu0 0.0
        %396 = vmatprep.subr.mxu0 0.0
        %397 = vmatpush2.msra.mxu0 0.0
        %398 = vmatprep.subr.mxu0 0.0
        %399 = vmatpush2.msra.mxu0 0.0
        %400 = vmatprep.subr.mxu0 0.0
        %401 = vmatpush2.msra.mxu0 0.0
        %402 = vmatprep.subr.mxu0 0.0
        %403 = vmatpush2.msra.mxu0 0.0
        %404 = vmatprep.subr.mxu0 0.0
        %405 = vmatpush2.msra.mxu0 0.0
        %406 = vmatprep.subr.mxu0 0.0
        %407 = vmatpush2.msra.mxu0 0.0
        %408 = vmatprep.subr.mxu0 0.0
        %409 = vmatpush2.msra.mxu0 0.0
        %410 = vmatprep.mubr.f32.mxu0 0.0
        %411 = vmatmul.mubr.f32.gmra.mxu0 %v243
        %v412 = vpop.f32.mrf.mxu0
        %v413 = vadd.f32 0.0, %v412
        %v414 = vpop.f32.mrf.mxu0
        %415 = vdwg.mxu0
        %v416 = vmul.f32 %v327, %v327
        %v417 = vmul.f32 %v413, %v413
        %v418 = vadd.f32 %v416, %v417
        %v419 = vrsqrt.pop %v418
        %v420 = vmul.f32 %v418, %v419
        %vm421 = vcmp.eq.f32.partialorder %v418, inf
        %v422 = vsel %vm421, %v418, %v420
        %vm423 = vcmp.eq.f32.partialorder %v418, 0.0
        %v424 = vand.u32 %v418, 2147483648
        %v425 = vsel %vm423, %v424, %v422
        %426 = vst [vmem:[%s242] sm:$0xff] %v425
        %s427 = sand.u32 %s121, 1
        %s428 = scalar_lea.sflag [#allocation4], %s427
        %s429 = sand.u32 %s121, 1
        %s430 = smul.addr %s429, 8
        %s431 = scalar_lea.vmem [#allocation8], %s430
        // Predicated region
        $region45: #{tpu_custom_call.1} parent=31 // pred_check
          %p432 = pneg %p131
        $region46: #{tpu_custom_call.1} parent=31 // pred_check_branch
          %434 = sbr.rel (%p432) target = $region48
        $region47: #{tpu_custom_call.1} parent=31 // pred_region
          %s436 = ssub.s32 128, 128
          %437 = vsyncadd %s428, %s436
          %s438 = sadd.s32 %s26, %s25
          %s439 = smul.addr %s438, 128
          %s440 = scalar_lea.hbm %s3, %s439
          %s442 = sshll.u32 %s431, 4
          %s443 = int_to_ptr.vmem [resolvable:$true] %s442
          %445 = dma.vmem_to_hbm [thread:$0]  %s443, 128, %s440, %s428
        $region48: #{tpu_custom_call.1} parent=31 // pred_fallthru
          _
      $region32: #{tpu_custom_call.1} parent=5 // pred_fallthru
        _
      %p446 = scmp.le.s32.totalorder 2, %s16
      // Predicated region
      $region49: #{tpu_custom_call.1} parent=5 // pred_check
        %p447 = pneg %p446
      $region50: #{tpu_custom_call.1} parent=5 // pred_check_branch
        %449 = sbr.rel (%p447) target = $region52
      $region51: #{tpu_custom_call.1} parent=5 // pred_region
        %s450 = ssub.s32 %s16, 2
        // Predicated region
        $region53: #{tpu_custom_call.1} parent=51 // pred_check
          %p451 = pneg %p137
        $region54: #{tpu_custom_call.1} parent=51 // pred_check_branch
          %453 = sbr.rel (%p451) target = $region56
        $region55: #{tpu_custom_call.1} parent=51 // pred_region
          %s454 = sand.u32 %s122, 1
          %s455 = scalar_lea.sflag [#allocation4], %s454
          %s456 = sand.u32 %s122, 1
          %s457 = smul.addr %s456, 8
          %s458 = scalar_lea.vmem [#allocation8], %s457
          %459 = dma.done %s455, 128
        $region56: #{tpu_custom_call.1} parent=51 // pred_fallthru
          _
      $region52: #{tpu_custom_call.1} parent=5 // pred_fallthru
        _
    $region6: #{tpu_custom_call.1} parent=1 // loop_footer
      %s20 = sadd.s32 1, %s16
    $region7: #{tpu_custom_call.1} parent=1 // loop_footer_branch
      %15 = sbr.rel target = $region3
    $region8: #{tpu_custom_call.1} parent=1 // loop_exit
      _
    %460 = vsyncpa [#allocation3], 1
    %s461 = scalar_lea.sflag [#allocation3], 1
    %462 = vsyncpa %s461, 1
    %463 = vsyncpa [#allocation6], 1
    %464 = vsyncpa [#allocation4], 1
    %s465 = scalar_lea.sflag [#allocation4], 1
    %466 = vsyncpa %s465, 1

</llo_original>
